<compile_context>
chip_gen: v5e
topology: v5e:2x2
jax: 0.10.0
libtpu: 0.0.40
codegen_flags: <defaults>
</compile_context>

<pallas_src>
import jax
import jax.numpy as jnp
from jax.experimental import pallas as pl
from jax.experimental.pallas import tpu as pltpu


# ---------------------------------------------------------------------------
# One-time, cached probe: can this jax build lower pltpu.einshape grouping?
# ---------------------------------------------------------------------------
_EINSHAPE_OK = None


def _probe_einshape():
    """Probe once whether the fused einshape relayout lowers on this build."""
    global _EINSHAPE_OK
    if _EINSHAPE_OK is not None:
        return _EINSHAPE_OK
    if not hasattr(pltpu, "einshape"):
        _EINSHAPE_OK = False
        return _EINSHAPE_OK

    def _probe_kernel(x_ref, o_ref):
        o_ref[...] = pltpu.einshape("bch->b(hc)", x_ref[...])

    try:
        probe = pl.pallas_call(
            _probe_kernel,
            out_shape=jax.ShapeDtypeStruct((8, 3 * 16), jnp.float32),
        )
        x = jnp.zeros((8, 3, 16), jnp.float32)
        pl.lower_as_mlir(probe, x)  # triggers Pallas->Mosaic lowering, no run
        _EINSHAPE_OK = True
    except Exception:
        _EINSHAPE_OK = False
    return _EINSHAPE_OK


# ---------------------------------------------------------------------------
# Generation-aware VMEM budgeting.
# ---------------------------------------------------------------------------
def _vmem_budget_and_limit():
    """(block budget, vmem_limit_bytes) derived from the chip's physical VMEM."""
    phys = None
    try:
        phys = getattr(pltpu.get_tpu_info(), "vmem_capacity_bytes", None)
    except Exception:
        phys = None
    if phys is None:
        phys = 64 << 20                      # assume the smallest (v7x-sized)
    if phys >= (128 << 20):                  # v5e / v6e: 128 MiB physical
        budget, limit = 48 << 20, 100 << 20
    else:                                    # v7x: 64 MiB physical (or unknown)
        budget = min(32 << 20, phys // 2)
        limit = min(48 << 20, max(phys - (8 << 20), budget))
    return budget, max(limit, budget)


def _pick_batch_block(batch, budget_bytes, per_row_bytes):
    """Largest legal batch block under the budget.

    Legal = divides batch AND (multiple of 8 sublanes OR the whole batch).
    When batch >= 16 we cap at batch//2 so there are >=2 grid steps (v7x 2-TC
    sharding + DMA/compute overlap on every generation).
    """
    cap = max(1, budget_bytes // max(1, per_row_bytes))
    if batch < 8 or batch % 8 != 0:
        return batch                         # only the full batch is legal
    cands = [bb for bb in range(8, batch + 1, 8) if batch % bb == 0]
    if batch >= 16:
        halved = [bb for bb in cands if bb <= batch // 2]
        if halved:
            cands = halved
    fitting = [bb for bb in cands if bb <= cap]
    return max(fitting) if fitting else min(cands)


def _plan_groups(flat_shapes, itemsize, batch, budget_bytes):
    """Greedily pack inputs into groups whose footprint fits the VMEM budget
    at the minimal legal batch block (tiles the concatenated axis)."""
    min_bb = 8 if (batch >= 8 and batch % 8 == 0) else batch
    # 5x model per review: in + out double-buffered (4x) + ~1x relayout temp.
    cap_elems = max(1, budget_bytes // (5 * min_bb * itemsize))
    groups, cur, cur_elems = [], [], 0
    for idx, (_, c, hw) in enumerate(flat_shapes):
        sz = c * hw
        if cur and cur_elems + sz > cap_elems:
            groups.append(cur)
            cur, cur_elems = [], 0
        cur.append(idx)
        cur_elems += sz
        # TODO(synk): a single input larger than cap_elems still forms its own
        # group (HW-axis sub-tiling is blocked by the (8,128) lane rule for
        # typical SSD spatial sizes); it runs with min_bb and extra vmem_limit.
    if cur:
        groups.append(cur)
    return groups


# ---------------------------------------------------------------------------
# Kernel body: fused per-chunk relayout + static-offset dense stores.
# ---------------------------------------------------------------------------
def _make_group_kernel(chunk_sizes, use_einshape):
    offsets = [0]
    for s in chunk_sizes:
        offsets.append(offsets[-1] + s)

    def kernel(*refs):
        in_refs, out_ref = refs[:-1], refs[-1]
        for i, x_ref in enumerate(in_refs):
            bb, c, hw = x_ref.shape
            x = x_ref[...]
            if c == 1 or hw == 1:
                # NHWC flatten == NCHW flatten when C or H*W is singleton:
                # skip the transpose, keep the XLU free for the big maps.
                chunk = x.reshape(bb, c * hw)
            elif use_einshape:
                # Fused, lane-layout-aware transpose+flatten (no VMEM temp).
                chunk = pltpu.einshape("bch->b(hc)", x)
            else:
                # Proven path: XLU transpose + reshape (the reshape may
                # materialize a VMEM copy; hidden under HBM DMA for this
                # mem-bound relayout).
                chunk = jnp.swapaxes(x, 1, 2).reshape(bb, c * hw)
            # Per-chunk direct store at a static offset -- no jnp.concatenate
            # temporary; interiors stay lane-dense, only chunk boundaries mask.
            out_ref[:, offsets[i]:offsets[i + 1]] = chunk

    return kernel


def _build_group_call(g_shapes, dtype, batch, bb, g_total, use_einshape,
                      vmem_limit, itemsize):
    grid = (batch // bb,)
    in_specs = [pl.BlockSpec((bb, c, hw), lambda b: (b, 0, 0))
                for (_, c, hw) in g_shapes]
    out_specs = pl.BlockSpec((bb, g_total), lambda b: (b, 0))
    chunk_sizes = [c * hw for (_, c, hw) in g_shapes]
    kernel = _make_group_kernel(chunk_sizes, use_einshape)
    nbytes = batch * g_total * itemsize
    # Never request less than the estimated block footprint.
    call_limit = max(vmem_limit, 5 * bb * g_total * itemsize)
    return pl.pallas_call(
        kernel,
        out_shape=jax.ShapeDtypeStruct((batch, g_total), dtype),
        grid=grid,
        in_specs=in_specs,
        out_specs=out_specs,
        # Batch axis is embarrassingly parallel -> shards across v7x's 2 TCs;
        # harmless no-op on single-TC v5e/v6e.
        compiler_params=pltpu.CompilerParams(
            dimension_semantics=("parallel",),
            vmem_limit_bytes=int(call_limit),
        ),
        # Pure bandwidth: read everything once, write everything once.
        cost_estimate=pl.CostEstimate(
            flops=0, transcendentals=0, bytes_accessed=2 * nbytes),
    )


def _run(flat_in, flat_shapes, batch, dtype, use_einshape, budget, limit):
    itemsize = jnp.dtype(dtype).itemsize
    groups = _plan_groups(flat_shapes, itemsize, batch, budget)
    outs = []
    for g in groups:
        g_shapes = [flat_shapes[i] for i in g]
        g_total = sum(c * hw for (_, c, hw) in g_shapes)
        per_row = 5 * g_total * itemsize
        bb = _pick_batch_block(batch, budget, per_row)
        call = _build_group_call(g_shapes, dtype, batch, bb, g_total,
                                 use_einshape, limit, itemsize)
        outs.append(call(*[flat_in[i] for i in g]))
    if len(outs) == 1:
        return outs[0]
    # Multiple groups only when a single row exceeds the VMEM budget (conf-head
    # scale); the outer concat costs one extra HBM pass over the output only.
    return jnp.concatenate(outs, axis=1)


# ---------------------------------------------------------------------------
# Public wrapper: FlattenConcat.forward
# ---------------------------------------------------------------------------
def flatten_concat(inputs, num_ssd_boxes):
    """Pallas implementation of FlattenConcat.forward for a tuple of NCHW maps."""
    global _EINSHAPE_OK
    batch = inputs[0].shape[0]
    dtype = inputs[0].dtype
    assert all(x.shape[0] == batch and x.dtype == dtype for x in inputs)

    # Glue: collapse contiguous spatial dims (metadata-only reshape in XLA).
    flat_in = [x.reshape(batch, x.shape[1], x.shape[2] * x.shape[3]) for x in inputs]
    flat_shapes = [x.shape for x in flat_in]
    total = sum(c * hw for (_, c, hw) in flat_shapes)
    assert total % num_ssd_boxes == 0, (
        "sum_i C_i*H_i*W_i must be divisible by num_ssd_boxes")

    budget, limit = _vmem_budget_and_limit()
    use_einshape = _probe_einshape()
    try:
        res = _run(flat_in, flat_shapes, batch, dtype, use_einshape, budget, limit)
    except Exception:
        if not use_einshape:
            raise
        # Permanently cache the decision; never re-attempt einshape this process.
        _EINSHAPE_OK = False
        res = _run(flat_in, flat_shapes, batch, dtype, False, budget, limit)

    # Glue: same as torch `res.reshape(batch_size, num_ssd_boxes, -1)`.
    return res.reshape(batch, num_ssd_boxes, -1)


def flatten_concat_reference(inputs, num_ssd_boxes):
    """Pure-JAX reference reproducing the PyTorch semantics."""
    batch = inputs[0].shape[0]
    chunks = [jnp.transpose(x, (0, 2, 3, 1)).reshape(batch, -1) for x in inputs]
    return jnp.concatenate(chunks, axis=1).reshape(batch, num_ssd_boxes, -1)


if __name__ == "__main__":
    key = jax.random.PRNGKey(0)
    k1, k2, k3, k4 = jax.random.split(key, 4)

    # SSD-like multi-scale location predictions (NCHW), C = num_anchors * 4:
    x1 = jax.random.normal(k1, (2, 12, 8, 8), jnp.float32)  # 3 anchors @ 8x8
    x2 = jax.random.normal(k2, (2, 8, 4, 4), jnp.float32)   # 2 anchors @ 4x4
    x3 = jax.random.normal(k3, (2, 8, 2, 2), jnp.float32)   # 2 anchors @ 2x2
    x4 = jax.random.normal(k4, (2, 8, 1, 1), jnp.float32)   # 2 anchors @ 1x1 (HW==1 path)
    inputs = (x1, x2, x3, x4)

    # num_ssd_boxes = sum_i H_i*W_i*anchors_i
    num_ssd_boxes = 8 * 8 * 3 + 4 * 4 * 2 + 2 * 2 * 2 + 1 * 1 * 2  # 234

    out = flatten_concat(inputs, num_ssd_boxes)
    out = jax.block_until_ready(out)

    ref = flatten_concat_reference(inputs, num_ssd_boxes)
    assert out.shape == (2, num_ssd_boxes, 4), out.shape
    assert jnp.allclose(out, ref), "Pallas output mismatches reference"

    # Second call exercises the cached einshape/fallback decision (no re-probe).
    out2 = jax.block_until_ready(flatten_concat(inputs, num_ssd_boxes))
    assert jnp.allclose(out2, ref)

    print("KERNEL_OK")
</pallas_src>

<mosaic_0001>
module attributes {stable_mosaic.version = 11 : i64} {
  func.func @kernel(%arg0: i32, %arg1: memref<2x12x64xf32, #tpu.memory_space<vmem>>, %arg2: memref<2x8x16xf32, #tpu.memory_space<vmem>>, %arg3: memref<2x8x4xf32, #tpu.memory_space<vmem>>, %arg4: memref<2x8x1xf32, #tpu.memory_space<vmem>>, %arg5: memref<2x936xf32, #tpu.memory_space<vmem>>) attributes {dimension_semantics = [#tpu.dimension_semantics<parallel>], iteration_bounds = array<i64: 1>, scalar_prefetch = 0 : i64, scratch_operands = 0 : i64, tpu.core_type = #tpu.core_type<tc>, window_params = [{transform_indices = @transform_0, window_bounds = array<i64: 2, 12, 64>}, {transform_indices = @transform_1, window_bounds = array<i64: 2, 8, 16>}, {transform_indices = @transform_2, window_bounds = array<i64: 2, 8, 4>}, {transform_indices = @transform_3, window_bounds = array<i64: 2, 8, 1>}, {transform_indices = @transform_4, window_bounds = array<i64: 2, 936>}]} {
    %c0 = arith.constant 0 : index
    %c0_0 = arith.constant 0 : index
    %c0_1 = arith.constant 0 : index
    %0 = vector.load %arg1[%c0, %c0_0, %c0_1] : memref<2x12x64xf32, #tpu.memory_space<vmem>>, vector<2x12x64xf32>
    %1 = tpu.transpose %0, [0, 2, 1] : vector<2x12x64xf32> -> vector<2x64x12xf32>
    %2 = vector.shape_cast %1 : vector<2x64x12xf32> to vector<2x768xf32>
    %c0_2 = arith.constant 0 : index
    %c0_3 = arith.constant 0 : index
    %3 = vector.load %arg5[%c0_2, %c0_3] : memref<2x936xf32, #tpu.memory_space<vmem>>, vector<2x768xf32>
    tpu.vector_store %arg5[%c0_2, %c0_3], %2 {strides = array<i32>} : memref<2x936xf32, #tpu.memory_space<vmem>>, vector<2x768xf32>,
    %c0_4 = arith.constant 0 : index
    %c0_5 = arith.constant 0 : index
    %c0_6 = arith.constant 0 : index
    %4 = vector.load %arg2[%c0_4, %c0_5, %c0_6] : memref<2x8x16xf32, #tpu.memory_space<vmem>>, vector<2x8x16xf32>
    %5 = tpu.transpose %4, [0, 2, 1] : vector<2x8x16xf32> -> vector<2x16x8xf32>
    %6 = vector.shape_cast %5 : vector<2x16x8xf32> to vector<2x128xf32>
    %c0_7 = arith.constant 0 : index
    %c768 = arith.constant 768 : index
    %7 = vector.load %arg5[%c0_7, %c768] : memref<2x936xf32, #tpu.memory_space<vmem>>, vector<2x128xf32>
    tpu.vector_store %arg5[%c0_7, %c768], %6 {strides = array<i32>} : memref<2x936xf32, #tpu.memory_space<vmem>>, vector<2x128xf32>,
    %c0_8 = arith.constant 0 : index
    %c0_9 = arith.constant 0 : index
    %c0_10 = arith.constant 0 : index
    %8 = vector.load %arg3[%c0_8, %c0_9, %c0_10] : memref<2x8x4xf32, #tpu.memory_space<vmem>>, vector<2x8x4xf32>
    %9 = tpu.transpose %8, [0, 2, 1] : vector<2x8x4xf32> -> vector<2x4x8xf32>
    %10 = vector.shape_cast %9 : vector<2x4x8xf32> to vector<2x32xf32>
    %c0_11 = arith.constant 0 : index
    %c896 = arith.constant 896 : index
    %11 = vector.load %arg5[%c0_11, %c896] : memref<2x936xf32, #tpu.memory_space<vmem>>, vector<2x32xf32>
    tpu.vector_store %arg5[%c0_11, %c896], %10 {strides = array<i32>} : memref<2x936xf32, #tpu.memory_space<vmem>>, vector<2x32xf32>,
    %c0_12 = arith.constant 0 : index
    %c0_13 = arith.constant 0 : index
    %c0_14 = arith.constant 0 : index
    %12 = vector.load %arg4[%c0_12, %c0_13, %c0_14] : memref<2x8x1xf32, #tpu.memory_space<vmem>>, vector<2x8x1xf32>
    %13 = vector.shape_cast %12 : vector<2x8x1xf32> to vector<2x8xf32>
    %c0_15 = arith.constant 0 : index
    %c928 = arith.constant 928 : index
    %14 = vector.load %arg5[%c0_15, %c928] : memref<2x936xf32, #tpu.memory_space<vmem>>, vector<2x8xf32>
    tpu.vector_store %arg5[%c0_15, %c928], %13 {strides = array<i32>} : memref<2x936xf32, #tpu.memory_space<vmem>>, vector<2x8xf32>,
    return
  }
  func.func @transform_0(%arg0: i32) -> (i32, i32, i32) {
    %c0_i32 = arith.constant 0 : i32
    %c0_i32_0 = arith.constant 0 : i32
    %c0_i32_1 = arith.constant 0 : i32
    return %arg0, %c0_i32, %c0_i32_0 : i32, i32, i32
  }
  func.func @transform_1(%arg0: i32) -> (i32, i32, i32) {
    %c0_i32 = arith.constant 0 : i32
    %c0_i32_0 = arith.constant 0 : i32
    %c0_i32_1 = arith.constant 0 : i32
    return %arg0, %c0_i32, %c0_i32_0 : i32, i32, i32
  }
  func.func @transform_2(%arg0: i32) -> (i32, i32, i32) {
    %c0_i32 = arith.constant 0 : i32
    %c0_i32_0 = arith.constant 0 : i32
    %c0_i32_1 = arith.constant 0 : i32
    return %arg0, %c0_i32, %c0_i32_0 : i32, i32, i32
  }
  func.func @transform_3(%arg0: i32) -> (i32, i32, i32) {
    %c0_i32 = arith.constant 0 : i32
    %c0_i32_0 = arith.constant 0 : i32
    %c0_i32_1 = arith.constant 0 : i32
    return %arg0, %c0_i32, %c0_i32_0 : i32, i32, i32
  }
  func.func @transform_4(%arg0: i32) -> (i32, i32) {
    %c0_i32 = arith.constant 0 : i32
    %c0_i32_0 = arith.constant 0 : i32
    return %arg0, %c0_i32 : i32, i32
  }
}

</mosaic_0001>

<llo_original>
// kernel: tpu_custom_call.1
$region0: #{tpu_custom_call.1}
  #allocation0 [shape = 'u32[]', space=smem, size = 0x4, offset = 0x4, fixed_abs, tag = 'smem constant byte address 0x4 - core index']
  #allocation1 [shape = 'u32[72,128]{1,0:T(1,128)}', space=vmem, size = 0x9000, scoped, tag = 'internal scratch']
  %s0 = inlined_call_operand.vmem [shape: f32[2,12,64], index: 0, kind: input, shape index: {}]
  %s1 = inlined_call_operand.vmem [shape: f32[2,8,16], index: 1, kind: input, shape index: {}]
  %s2 = inlined_call_operand.vmem [shape: f32[2,8,4], index: 2, kind: input, shape index: {}]
  %s3 = inlined_call_operand.vmem [shape: f32[2,8,1], index: 3, kind: input, shape index: {}]
  %s4 = inlined_call_operand.hbm [shape: f32[2,936], index: 4, kind: output, shape index: {}]
  %s5 = sld [smem:[#allocation0]]
  $region26: #{tpu_custom_call.1} parent=0
    _
  %s7 = ssub.s32 1, %s5
  %s8 = scalar_select 0, %s7, %s5
  $region1: #{tpu_custom_call.1} parent=0
    #allocation2 [shape = 'u8[8192]{0}', space=vmem, size = 0x2000, scoped, tag = 'output window, operand 0, single buffered']
    #allocation3 [shape = 's32[1]{0}', space=sflag, size = 0x4, scoped, tag = 'scoped memory for tpu_custom_call.1']
    %9 = vsyncpa [#allocation3], 0
    // Predicated region
    $region2: #{tpu_custom_call.1} parent=1 // pred_check
      _
    $region3: #{tpu_custom_call.1} parent=1 // pred_check_branch
      %11 = sbr.rel (0) target = $region5
    $region4: #{tpu_custom_call.1} parent=1 // pred_region
      _
    $region5: #{tpu_custom_call.1} parent=1 // pred_fallthru
      _
    // Predicated region
    $region6: #{tpu_custom_call.1} parent=1 // pred_check
      _
    $region7: #{tpu_custom_call.1} parent=1 // pred_check_branch
      %13 = sbr.rel (0) target = $region9
    $region8: #{tpu_custom_call.1} parent=1 // pred_region
      _
    $region9: #{tpu_custom_call.1} parent=1 // pred_fallthru
      _
    // Predicated region
    $region10: #{tpu_custom_call.1} parent=1 // pred_check
      _
    $region11: #{tpu_custom_call.1} parent=1 // pred_check_branch
      %15 = sbr.rel (0) target = $region13
    $region12: #{tpu_custom_call.1} parent=1 // pred_region
      _
    $region13: #{tpu_custom_call.1} parent=1 // pred_fallthru
      _
    // Predicated region
    $region14: #{tpu_custom_call.1} parent=1 // pred_check
      _
    $region15: #{tpu_custom_call.1} parent=1 // pred_check_branch
      %17 = sbr.rel (0) target = $region17
    $region16: #{tpu_custom_call.1} parent=1 // pred_region
      _
    $region17: #{tpu_custom_call.1} parent=1 // pred_fallthru
      _
    %v18 = vld [vmem:[%s0] sm:$0xff]
    %v19 = vld [vmem:[%s0 + $0x8] sm:$0xf]
    %v20 = vld [vmem:[%s0 + $0x10] sm:$0xff]
    %v21 = vld [vmem:[%s0 + $0x18] sm:$0xf]
    %22 = vxpose.xlu0.b32.start [1/16] %v18, 128
    %23 = vxpose.xlu0.b32.cont [2/16] %v19, 128
    %24 = vxpose.xlu0.b32.cont [3/16] 0.0, 128
    %25 = vxpose.xlu0.b32.cont [4/16] 0.0, 128
    %26 = vxpose.xlu0.b32.cont [5/16] 0.0, 128
    %27 = vxpose.xlu0.b32.cont [6/16] 0.0, 128
    %28 = vxpose.xlu0.b32.cont [7/16] 0.0, 128
    %29 = vxpose.xlu0.b32.cont [8/16] 0.0, 128
    %30 = vxpose.xlu0.b32.cont [9/16] 0.0, 128
    %31 = vxpose.xlu0.b32.cont [10/16] 0.0, 128
    %32 = vxpose.xlu0.b32.cont [11/16] 0.0, 128
    %33 = vxpose.xlu0.b32.cont [12/16] 0.0, 128
    %34 = vxpose.xlu0.b32.cont [13/16] 0.0, 128
    %35 = vxpose.xlu0.b32.cont [14/16] 0.0, 128
    %36 = vxpose.xlu0.b32.cont [15/16] 0.0, 128
    %37 = vxpose.xlu0.b32.end [16/16] 0.0, 128
    %v38 = vpop.trf.xlu0
    %v39 = vpop.trf.xlu0
    %v40 = vpop.trf.xlu0
    %v41 = vpop.trf.xlu0
    %v42 = vpop.trf.xlu0
    %v43 = vpop.trf.xlu0
    %v44 = vpop.trf.xlu0
    %v45 = vpop.trf.xlu0
    %v46 = vpop.trf.xlu0
    %v47 = vpop.trf.xlu0
    %v48 = vpop.trf.xlu0
    %v49 = vpop.trf.xlu0
    %v50 = vpop.trf.xlu0
    %v51 = vpop.trf.xlu0
    %v52 = vpop.trf.xlu0
    %v53 = vpop.trf.xlu0
    %54 = vxpose.xlu0.b32.start [1/16] %v20, 128
    %55 = vxpose.xlu0.b32.cont [2/16] %v21, 128
    %56 = vxpose.xlu0.b32.cont [3/16] 0.0, 128
    %57 = vxpose.xlu0.b32.cont [4/16] 0.0, 128
    %58 = vxpose.xlu0.b32.cont [5/16] 0.0, 128
    %59 = vxpose.xlu0.b32.cont [6/16] 0.0, 128
    %60 = vxpose.xlu0.b32.cont [7/16] 0.0, 128
    %61 = vxpose.xlu0.b32.cont [8/16] 0.0, 128
    %62 = vxpose.xlu0.b32.cont [9/16] 0.0, 128
    %63 = vxpose.xlu0.b32.cont [10/16] 0.0, 128
    %64 = vxpose.xlu0.b32.cont [11/16] 0.0, 128
    %65 = vxpose.xlu0.b32.cont [12/16] 0.0, 128
    %66 = vxpose.xlu0.b32.cont [13/16] 0.0, 128
    %67 = vxpose.xlu0.b32.cont [14/16] 0.0, 128
    %68 = vxpose.xlu0.b32.cont [15/16] 0.0, 128
    %69 = vxpose.xlu0.b32.end [16/16] 0.0, 128
    %v70 = vpop.trf.xlu0
    %v71 = vpop.trf.xlu0
    %v72 = vpop.trf.xlu0
    %v73 = vpop.trf.xlu0
    %v74 = vpop.trf.xlu0
    %v75 = vpop.trf.xlu0
    %v76 = vpop.trf.xlu0
    %v77 = vpop.trf.xlu0
    %v78 = vpop.trf.xlu0
    %v79 = vpop.trf.xlu0
    %v80 = vpop.trf.xlu0
    %v81 = vpop.trf.xlu0
    %v82 = vpop.trf.xlu0
    %v83 = vpop.trf.xlu0
    %v84 = vpop.trf.xlu0
    %v85 = vpop.trf.xlu0
    %v86 = vrot.slane %v38, 4
    %vm87 = vcmask 1047556
    %v88 = vsel %vm87, 0.0, %v86
    %v90 = vunpack.c.l.s4 1983009808
    %v91 = vunpack.c.0.s8 %v90
    %v92 = vperm.slane %v38, %v91
    %v94 = vunpack.c.l.s4 1983009808
    %v95 = vunpack.c.0.s8 %v94
    %v96 = vperm.slane %v88, %v95
    %v97 = vrot.slane %v70, 4
    %v98 = vsel %vm87, 0.0, %v97
    %v100 = vunpack.c.l.s4 1983009808
    %v101 = vunpack.c.0.s8 %v100
    %v102 = vperm.slane %v70, %v101
    %v104 = vunpack.c.l.s4 1983009808
    %v105 = vunpack.c.0.s8 %v104
    %v106 = vperm.slane %v98, %v105
    %v107 = vrot.slane %v102, 4
    %v108 = vsel %vm87, %v107, %v92
    %v109 = vrot.slane %v92, 4
    %v110 = vsel %vm87, %v102, %v109
    %v112 = vunpack.c.l.s4 1934713408
    %v113 = vunpack.c.0.s8 %v112
    %v114 = vperm.slane %v108, %v113
    %v116 = vunpack.c.l.s4 1934713408
    %v117 = vunpack.c.0.s8 %v116
    %v118 = vperm.slane %v110, %v117
    %v119 = vrot.slane %v106, 4
    %v120 = vsel %vm87, %v119, %v96
    %v121 = vrot.slane %v96, 4
    %v122 = vsel %vm87, %v106, %v121
    %v124 = vunpack.c.l.s4 1934713408
    %v125 = vunpack.c.0.s8 %v124
    %v126 = vperm.slane %v120, %v125
    %v128 = vunpack.c.l.s4 1934713408
    %v129 = vunpack.c.0.s8 %v128
    %v130 = vperm.slane %v122, %v129
    %v131 = vrot.slane %v114, 4
    %v132 = vsel %vm87, 0.0, %v131
    %v133 = vrot.slane %v118, 4
    %v134 = vsel %vm87, 0.0, %v133
    %v135 = vrot.slane %v126, 4
    %v136 = vsel %vm87, 0.0, %v135
    %v137 = vrot.slane %v130, 4
    %v138 = vsel %vm87, 0.0, %v137
    %v139 = vrot.slane %v39, 4
    %v140 = vsel %vm87, 0.0, %v139
    %v142 = vunpack.c.l.s4 1983009808
    %v143 = vunpack.c.0.s8 %v142
    %v144 = vperm.slane %v39, %v143
    %v146 = vunpack.c.l.s4 1983009808
    %v147 = vunpack.c.0.s8 %v146
    %v148 = vperm.slane %v140, %v147
    %v149 = vrot.slane %v71, 4
    %v150 = vsel %vm87, 0.0, %v149
    %v152 = vunpack.c.l.s4 1983009808
    %v153 = vunpack.c.0.s8 %v152
    %v154 = vperm.slane %v71, %v153
    %v156 = vunpack.c.l.s4 1983009808
    %v157 = vunpack.c.0.s8 %v156
    %v158 = vperm.slane %v150, %v157
    %v159 = vrot.slane %v154, 4
    %v160 = vsel %vm87, %v159, %v144
    %v161 = vrot.slane %v144, 4
    %v162 = vsel %vm87, %v154, %v161
    %v164 = vunpack.c.l.s4 1934713408
    %v165 = vunpack.c.0.s8 %v164
    %v166 = vperm.slane %v160, %v165
    %v168 = vunpack.c.l.s4 1934713408
    %v169 = vunpack.c.0.s8 %v168
    %v170 = vperm.slane %v162, %v169
    %v171 = vrot.slane %v158, 4
    %v172 = vsel %vm87, %v171, %v148
    %v173 = vrot.slane %v148, 4
    %v174 = vsel %vm87, %v158, %v173
    %v176 = vunpack.c.l.s4 1934713408
    %v177 = vunpack.c.0.s8 %v176
    %v178 = vperm.slane %v172, %v177
    %v180 = vunpack.c.l.s4 1934713408
    %v181 = vunpack.c.0.s8 %v180
    %v182 = vperm.slane %v174, %v181
    %v183 = vrot.slane %v166, 4
    %v184 = vsel %vm87, 0.0, %v183
    %v185 = vrot.slane %v170, 4
    %v186 = vsel %vm87, 0.0, %v185
    %v187 = vrot.slane %v178, 4
    %v188 = vsel %vm87, 0.0, %v187
    %v189 = vrot.slane %v182, 4
    %v190 = vsel %vm87, 0.0, %v189
    %v191 = vrot.slane %v40, 4
    %v192 = vsel %vm87, 0.0, %v191
    %v194 = vunpack.c.l.s4 1983009808
    %v195 = vunpack.c.0.s8 %v194
    %v196 = vperm.slane %v40, %v195
    %v198 = vunpack.c.l.s4 1983009808
    %v199 = vunpack.c.0.s8 %v198
    %v200 = vperm.slane %v192, %v199
    %v201 = vrot.slane %v72, 4
    %v202 = vsel %vm87, 0.0, %v201
    %v204 = vunpack.c.l.s4 1983009808
    %v205 = vunpack.c.0.s8 %v204
    %v206 = vperm.slane %v72, %v205
    %v208 = vunpack.c.l.s4 1983009808
    %v209 = vunpack.c.0.s8 %v208
    %v210 = vperm.slane %v202, %v209
    %v211 = vrot.slane %v206, 4
    %v212 = vsel %vm87, %v211, %v196
    %v213 = vrot.slane %v196, 4
    %v214 = vsel %vm87, %v206, %v213
    %v216 = vunpack.c.l.s4 1934713408
    %v217 = vunpack.c.0.s8 %v216
    %v218 = vperm.slane %v212, %v217
    %v220 = vunpack.c.l.s4 1934713408
    %v221 = vunpack.c.0.s8 %v220
    %v222 = vperm.slane %v214, %v221
    %v223 = vrot.slane %v210, 4
    %v224 = vsel %vm87, %v223, %v200
    %v225 = vrot.slane %v200, 4
    %v226 = vsel %vm87, %v210, %v225
    %v228 = vunpack.c.l.s4 1934713408
    %v229 = vunpack.c.0.s8 %v228
    %v230 = vperm.slane %v224, %v229
    %v232 = vunpack.c.l.s4 1934713408
    %v233 = vunpack.c.0.s8 %v232
    %v234 = vperm.slane %v226, %v233
    %v235 = vrot.slane %v218, 4
    %v236 = vsel %vm87, 0.0, %v235
    %v237 = vrot.slane %v222, 4
    %v238 = vsel %vm87, 0.0, %v237
    %v239 = vrot.slane %v230, 4
    %v240 = vsel %vm87, 0.0, %v239
    %v241 = vrot.slane %v234, 4
    %v242 = vsel %vm87, 0.0, %v241
    %v243 = vrot.slane %v41, 4
    %v244 = vsel %vm87, 0.0, %v243
    %v246 = vunpack.c.l.s4 1983009808
    %v247 = vunpack.c.0.s8 %v246
    %v248 = vperm.slane %v41, %v247
    %v250 = vunpack.c.l.s4 1983009808
    %v251 = vunpack.c.0.s8 %v250
    %v252 = vperm.slane %v244, %v251
    %v253 = vrot.slane %v73, 4
    %v254 = vsel %vm87, 0.0, %v253
    %v256 = vunpack.c.l.s4 1983009808
    %v257 = vunpack.c.0.s8 %v256
    %v258 = vperm.slane %v73, %v257
    %v260 = vunpack.c.l.s4 1983009808
    %v261 = vunpack.c.0.s8 %v260
    %v262 = vperm.slane %v254, %v261
    %v263 = vrot.slane %v258, 4
    %v264 = vsel %vm87, %v263, %v248
    %v265 = vrot.slane %v248, 4
    %v266 = vsel %vm87, %v258, %v265
    %v268 = vunpack.c.l.s4 1934713408
    %v269 = vunpack.c.0.s8 %v268
    %v270 = vperm.slane %v264, %v269
    %v272 = vunpack.c.l.s4 1934713408
    %v273 = vunpack.c.0.s8 %v272
    %v274 = vperm.slane %v266, %v273
    %v275 = vrot.slane %v262, 4
    %v276 = vsel %vm87, %v275, %v252
    %v277 = vrot.slane %v252, 4
    %v278 = vsel %vm87, %v262, %v277
    %v280 = vunpack.c.l.s4 1934713408
    %v281 = vunpack.c.0.s8 %v280
    %v282 = vperm.slane %v276, %v281
    %v284 = vunpack.c.l.s4 1934713408
    %v285 = vunpack.c.0.s8 %v284
    %v286 = vperm.slane %v278, %v285
    %v287 = vrot.slane %v270, 4
    %v288 = vsel %vm87, 0.0, %v287
    %v289 = vrot.slane %v274, 4
    %v290 = vsel %vm87, 0.0, %v289
    %v291 = vrot.slane %v282, 4
    %v292 = vsel %vm87, 0.0, %v291
    %v293 = vrot.slane %v286, 4
    %v294 = vsel %vm87, 0.0, %v293
    %v295 = vrot.slane %v42, 4
    %v296 = vsel %vm87, 0.0, %v295
    %v298 = vunpack.c.l.s4 1983009808
    %v299 = vunpack.c.0.s8 %v298
    %v300 = vperm.slane %v42, %v299
    %v302 = vunpack.c.l.s4 1983009808
    %v303 = vunpack.c.0.s8 %v302
    %v304 = vperm.slane %v296, %v303
    %v305 = vrot.slane %v74, 4
    %v306 = vsel %vm87, 0.0, %v305
    %v308 = vunpack.c.l.s4 1983009808
    %v309 = vunpack.c.0.s8 %v308
    %v310 = vperm.slane %v74, %v309
    %v312 = vunpack.c.l.s4 1983009808
    %v313 = vunpack.c.0.s8 %v312
    %v314 = vperm.slane %v306, %v313
    %v315 = vrot.slane %v310, 4
    %v316 = vsel %vm87, %v315, %v300
    %v317 = vrot.slane %v300, 4
    %v318 = vsel %vm87, %v310, %v317
    %v320 = vunpack.c.l.s4 1934713408
    %v321 = vunpack.c.0.s8 %v320
    %v322 = vperm.slane %v316, %v321
    %v324 = vunpack.c.l.s4 1934713408
    %v325 = vunpack.c.0.s8 %v324
    %v326 = vperm.slane %v318, %v325
    %v327 = vrot.slane %v314, 4
    %v328 = vsel %vm87, %v327, %v304
    %v329 = vrot.slane %v304, 4
    %v330 = vsel %vm87, %v314, %v329
    %v332 = vunpack.c.l.s4 1934713408
    %v333 = vunpack.c.0.s8 %v332
    %v334 = vperm.slane %v328, %v333
    %v336 = vunpack.c.l.s4 1934713408
    %v337 = vunpack.c.0.s8 %v336
    %v338 = vperm.slane %v330, %v337
    %v339 = vrot.slane %v322, 4
    %v340 = vsel %vm87, 0.0, %v339
    %v341 = vrot.slane %v326, 4
    %v342 = vsel %vm87, 0.0, %v341
    %v343 = vrot.slane %v334, 4
    %v344 = vsel %vm87, 0.0, %v343
    %v345 = vrot.slane %v338, 4
    %v346 = vsel %vm87, 0.0, %v345
    %v347 = vrot.slane %v43, 4
    %v348 = vsel %vm87, 0.0, %v347
    %v350 = vunpack.c.l.s4 1983009808
    %v351 = vunpack.c.0.s8 %v350
    %v352 = vperm.slane %v43, %v351
    %v354 = vunpack.c.l.s4 1983009808
    %v355 = vunpack.c.0.s8 %v354
    %v356 = vperm.slane %v348, %v355
    %v357 = vrot.slane %v75, 4
    %v358 = vsel %vm87, 0.0, %v357
    %v360 = vunpack.c.l.s4 1983009808
    %v361 = vunpack.c.0.s8 %v360
    %v362 = vperm.slane %v75, %v361
    %v364 = vunpack.c.l.s4 1983009808
    %v365 = vunpack.c.0.s8 %v364
    %v366 = vperm.slane %v358, %v365
    %v367 = vrot.slane %v362, 4
    %v368 = vsel %vm87, %v367, %v352
    %v369 = vrot.slane %v352, 4
    %v370 = vsel %vm87, %v362, %v369
    %v372 = vunpack.c.l.s4 1934713408
    %v373 = vunpack.c.0.s8 %v372
    %v374 = vperm.slane %v368, %v373
    %v376 = vunpack.c.l.s4 1934713408
    %v377 = vunpack.c.0.s8 %v376
    %v378 = vperm.slane %v370, %v377
    %v379 = vrot.slane %v366, 4
    %v380 = vsel %vm87, %v379, %v356
    %v381 = vrot.slane %v356, 4
    %v382 = vsel %vm87, %v366, %v381
    %v384 = vunpack.c.l.s4 1934713408
    %v385 = vunpack.c.0.s8 %v384
    %v386 = vperm.slane %v380, %v385
    %v388 = vunpack.c.l.s4 1934713408
    %v389 = vunpack.c.0.s8 %v388
    %v390 = vperm.slane %v382, %v389
    %v391 = vrot.slane %v374, 4
    %v392 = vsel %vm87, 0.0, %v391
    %v393 = vrot.slane %v378, 4
    %v394 = vsel %vm87, 0.0, %v393
    %v395 = vrot.slane %v386, 4
    %v396 = vsel %vm87, 0.0, %v395
    %v397 = vrot.slane %v390, 4
    %v398 = vsel %vm87, 0.0, %v397
    %v399 = vrot.slane %v44, 4
    %v400 = vsel %vm87, 0.0, %v399
    %v402 = vunpack.c.l.s4 1983009808
    %v403 = vunpack.c.0.s8 %v402
    %v404 = vperm.slane %v44, %v403
    %v406 = vunpack.c.l.s4 1983009808
    %v407 = vunpack.c.0.s8 %v406
    %v408 = vperm.slane %v400, %v407
    %v409 = vrot.slane %v76, 4
    %v410 = vsel %vm87, 0.0, %v409
    %v412 = vunpack.c.l.s4 1983009808
    %v413 = vunpack.c.0.s8 %v412
    %v414 = vperm.slane %v76, %v413
    %v416 = vunpack.c.l.s4 1983009808
    %v417 = vunpack.c.0.s8 %v416
    %v418 = vperm.slane %v410, %v417
    %v419 = vrot.slane %v414, 4
    %v420 = vsel %vm87, %v419, %v404
    %v421 = vrot.slane %v404, 4
    %v422 = vsel %vm87, %v414, %v421
    %v424 = vunpack.c.l.s4 1934713408
    %v425 = vunpack.c.0.s8 %v424
    %v426 = vperm.slane %v420, %v425
    %v428 = vunpack.c.l.s4 1934713408
    %v429 = vunpack.c.0.s8 %v428
    %v430 = vperm.slane %v422, %v429
    %v431 = vrot.slane %v418, 4
    %v432 = vsel %vm87, %v431, %v408
    %v433 = vrot.slane %v408, 4
    %v434 = vsel %vm87, %v418, %v433
    %v436 = vunpack.c.l.s4 1934713408
    %v437 = vunpack.c.0.s8 %v436
    %v438 = vperm.slane %v432, %v437
    %v440 = vunpack.c.l.s4 1934713408
    %v441 = vunpack.c.0.s8 %v440
    %v442 = vperm.slane %v434, %v441
    %v443 = vrot.slane %v426, 4
    %v444 = vsel %vm87, 0.0, %v443
    %v445 = vrot.slane %v430, 4
    %v446 = vsel %vm87, 0.0, %v445
    %v447 = vrot.slane %v438, 4
    %v448 = vsel %vm87, 0.0, %v447
    %v449 = vrot.slane %v442, 4
    %v450 = vsel %vm87, 0.0, %v449
    %v451 = vrot.slane %v45, 4
    %v452 = vsel %vm87, 0.0, %v451
    %v454 = vunpack.c.l.s4 1983009808
    %v455 = vunpack.c.0.s8 %v454
    %v456 = vperm.slane %v45, %v455
    %v458 = vunpack.c.l.s4 1983009808
    %v459 = vunpack.c.0.s8 %v458
    %v460 = vperm.slane %v452, %v459
    %v461 = vrot.slane %v77, 4
    %v462 = vsel %vm87, 0.0, %v461
    %v464 = vunpack.c.l.s4 1983009808
    %v465 = vunpack.c.0.s8 %v464
    %v466 = vperm.slane %v77, %v465
    %v468 = vunpack.c.l.s4 1983009808
    %v469 = vunpack.c.0.s8 %v468
    %v470 = vperm.slane %v462, %v469
    %v471 = vrot.slane %v466, 4
    %v472 = vsel %vm87, %v471, %v456
    %v473 = vrot.slane %v456, 4
    %v474 = vsel %vm87, %v466, %v473
    %v476 = vunpack.c.l.s4 1934713408
    %v477 = vunpack.c.0.s8 %v476
    %v478 = vperm.slane %v472, %v477
    %v480 = vunpack.c.l.s4 1934713408
    %v481 = vunpack.c.0.s8 %v480
    %v482 = vperm.slane %v474, %v481
    %v483 = vrot.slane %v470, 4
    %v484 = vsel %vm87, %v483, %v460
    %v485 = vrot.slane %v460, 4
    %v486 = vsel %vm87, %v470, %v485
    %v488 = vunpack.c.l.s4 1934713408
    %v489 = vunpack.c.0.s8 %v488
    %v490 = vperm.slane %v484, %v489
    %v492 = vunpack.c.l.s4 1934713408
    %v493 = vunpack.c.0.s8 %v492
    %v494 = vperm.slane %v486, %v493
    %v495 = vrot.slane %v478, 4
    %v496 = vsel %vm87, 0.0, %v495
    %v497 = vrot.slane %v482, 4
    %v498 = vsel %vm87, 0.0, %v497
    %v499 = vrot.slane %v490, 4
    %v500 = vsel %vm87, 0.0, %v499
    %v501 = vrot.slane %v494, 4
    %v502 = vsel %vm87, 0.0, %v501
    %504 = vrot.lane.b32.xlu0 %v132, 12
    %v505 = vpop.permute.xlu0 %504
    %508 = vrot.lane.b32.xlu0 %v118, 24
    %v509 = vpop.permute.xlu0 %508
    %512 = vrot.lane.b32.xlu0 %v134, 36
    %v513 = vpop.permute.xlu0 %512
    %516 = vrot.lane.b32.xlu0 %v126, 48
    %v517 = vpop.permute.xlu0 %516
    %520 = vrot.lane.b32.xlu0 %v136, 60
    %v521 = vpop.permute.xlu0 %520
    %524 = vrot.lane.b32.xlu0 %v130, 72
    %v525 = vpop.permute.xlu0 %524
    %528 = vrot.lane.b32.xlu0 %v138, 84
    %v529 = vpop.permute.xlu0 %528
    %532 = vrot.lane.b32.xlu0 %v166, 96
    %v533 = vpop.permute.xlu0 %532
    %536 = vrot.lane.b32.xlu0 %v184, 108
    %v537 = vpop.permute.xlu0 %536
    %540 = vrot.lane.b32.xlu0 %v170, 120
    %v541 = vpop.permute.xlu0 %540
    %544 = vrot.lane.b32.xlu0 %v186, 4
    %v545 = vpop.permute.xlu0 %544
    %548 = vrot.lane.b32.xlu0 %v178, 16
    %v549 = vpop.permute.xlu0 %548
    %552 = vrot.lane.b32.xlu0 %v188, 28
    %v553 = vpop.permute.xlu0 %552
    %556 = vrot.lane.b32.xlu0 %v182, 40
    %v557 = vpop.permute.xlu0 %556
    %560 = vrot.lane.b32.xlu0 %v190, 52
    %v561 = vpop.permute.xlu0 %560
    %564 = vrot.lane.b32.xlu0 %v218, 64
    %v565 = vpop.permute.xlu0 %564
    %568 = vrot.lane.b32.xlu0 %v236, 76
    %v569 = vpop.permute.xlu0 %568
    %572 = vrot.lane.b32.xlu0 %v222, 88
    %v573 = vpop.permute.xlu0 %572
    %576 = vrot.lane.b32.xlu0 %v238, 100
    %v577 = vpop.permute.xlu0 %576
    %580 = vrot.lane.b32.xlu0 %v230, 112
    %v581 = vpop.permute.xlu0 %580
    %584 = vrot.lane.b32.xlu0 %v240, 124
    %v585 = vpop.permute.xlu0 %584
    %588 = vrot.lane.b32.xlu0 %v234, 8
    %v589 = vpop.permute.xlu0 %588
    %592 = vrot.lane.b32.xlu0 %v242, 20
    %v593 = vpop.permute.xlu0 %592
    %596 = vrot.lane.b32.xlu0 %v270, 32
    %v597 = vpop.permute.xlu0 %596
    %600 = vrot.lane.b32.xlu0 %v288, 44
    %v601 = vpop.permute.xlu0 %600
    %604 = vrot.lane.b32.xlu0 %v274, 56
    %v605 = vpop.permute.xlu0 %604
    %608 = vrot.lane.b32.xlu0 %v290, 68
    %v609 = vpop.permute.xlu0 %608
    %612 = vrot.lane.b32.xlu0 %v282, 80
    %v613 = vpop.permute.xlu0 %612
    %616 = vrot.lane.b32.xlu0 %v292, 92
    %v617 = vpop.permute.xlu0 %616
    %620 = vrot.lane.b32.xlu0 %v286, 104
    %v621 = vpop.permute.xlu0 %620
    %624 = vrot.lane.b32.xlu0 %v294, 116
    %v625 = vpop.permute.xlu0 %624
    %628 = vrot.lane.b32.xlu0 %v340, 12
    %v629 = vpop.permute.xlu0 %628
    %632 = vrot.lane.b32.xlu0 %v326, 24
    %v633 = vpop.permute.xlu0 %632
    %636 = vrot.lane.b32.xlu0 %v342, 36
    %v637 = vpop.permute.xlu0 %636
    %640 = vrot.lane.b32.xlu0 %v334, 48
    %v641 = vpop.permute.xlu0 %640
    %644 = vrot.lane.b32.xlu0 %v344, 60
    %v645 = vpop.permute.xlu0 %644
    %648 = vrot.lane.b32.xlu0 %v338, 72
    %v649 = vpop.permute.xlu0 %648
    %652 = vrot.lane.b32.xlu0 %v346, 84
    %v653 = vpop.permute.xlu0 %652
    %656 = vrot.lane.b32.xlu0 %v374, 96
    %v657 = vpop.permute.xlu0 %656
    %660 = vrot.lane.b32.xlu0 %v392, 108
    %v661 = vpop.permute.xlu0 %660
    %664 = vrot.lane.b32.xlu0 %v378, 120
    %v665 = vpop.permute.xlu0 %664
    %668 = vrot.lane.b32.xlu0 %v394, 4
    %v669 = vpop.permute.xlu0 %668
    %672 = vrot.lane.b32.xlu0 %v386, 16
    %v673 = vpop.permute.xlu0 %672
    %676 = vrot.lane.b32.xlu0 %v396, 28
    %v677 = vpop.permute.xlu0 %676
    %680 = vrot.lane.b32.xlu0 %v390, 40
    %v681 = vpop.permute.xlu0 %680
    %684 = vrot.lane.b32.xlu0 %v398, 52
    %v685 = vpop.permute.xlu0 %684
    %688 = vrot.lane.b32.xlu0 %v426, 64
    %v689 = vpop.permute.xlu0 %688
    %692 = vrot.lane.b32.xlu0 %v444, 76
    %v693 = vpop.permute.xlu0 %692
    %696 = vrot.lane.b32.xlu0 %v430, 88
    %v697 = vpop.permute.xlu0 %696
    %700 = vrot.lane.b32.xlu0 %v446, 100
    %v701 = vpop.permute.xlu0 %700
    %704 = vrot.lane.b32.xlu0 %v438, 112
    %v705 = vpop.permute.xlu0 %704
    %708 = vrot.lane.b32.xlu0 %v448, 124
    %v709 = vpop.permute.xlu0 %708
    %712 = vrot.lane.b32.xlu0 %v442, 8
    %v713 = vpop.permute.xlu0 %712
    %716 = vrot.lane.b32.xlu0 %v450, 20
    %v717 = vpop.permute.xlu0 %716
    %720 = vrot.lane.b32.xlu0 %v478, 32
    %v721 = vpop.permute.xlu0 %720
    %724 = vrot.lane.b32.xlu0 %v496, 44
    %v725 = vpop.permute.xlu0 %724
    %728 = vrot.lane.b32.xlu0 %v482, 56
    %v729 = vpop.permute.xlu0 %728
    %732 = vrot.lane.b32.xlu0 %v498, 68
    %v733 = vpop.permute.xlu0 %732
    %736 = vrot.lane.b32.xlu0 %v490, 80
    %v737 = vpop.permute.xlu0 %736
    %740 = vrot.lane.b32.xlu0 %v500, 92
    %v741 = vpop.permute.xlu0 %740
    %744 = vrot.lane.b32.xlu0 %v494, 104
    %v745 = vpop.permute.xlu0 %744
    %748 = vrot.lane.b32.xlu0 %v502, 116
    %v749 = vpop.permute.xlu0 %748
    %vm751 = vcmask 97280
    %v752 = vsel %vm751, %v114, %v505
    %vm753 = vcmask 195584
    %v754 = vsel %vm753, %v752, %v509
    %vm755 = vcmask 293888
    %v756 = vsel %vm755, %v754, %v513
    %vm757 = vcmask 392192
    %v758 = vsel %vm757, %v756, %v517
    %vm759 = vcmask 490496
    %v760 = vsel %vm759, %v758, %v521
    %vm761 = vcmask 588800
    %v762 = vsel %vm761, %v760, %v525
    %vm763 = vcmask 687104
    %v764 = vsel %vm763, %v762, %v529
    %vm765 = vcmask 785408
    %v766 = vsel %vm765, %v764, %v533
    %vm767 = vcmask 883712
    %v768 = vsel %vm767, %v766, %v537
    %vm769 = vcmask 982016
    %v770 = vsel %vm769, %v768, %v541
    %vm771 = vcmask 31744
    %v772 = vsel %vm771, %v541, %v545
    %vm773 = vcmask 130048
    %v774 = vsel %vm773, %v772, %v549
    %vm775 = vcmask 228352
    %v776 = vsel %vm775, %v774, %v553
    %vm777 = vcmask 326656
    %v778 = vsel %vm777, %v776, %v557
    %vm779 = vcmask 424960
    %v780 = vsel %vm779, %v778, %v561
    %vm781 = vcmask 523264
    %v782 = vsel %vm781, %v780, %v565
    %vm783 = vcmask 621568
    %v784 = vsel %vm783, %v782, %v569
    %vm785 = vcmask 719872
    %v786 = vsel %vm785, %v784, %v573
    %vm787 = vcmask 818176
    %v788 = vsel %vm787, %v786, %v577
    %vm789 = vcmask 916480
    %v790 = vsel %vm789, %v788, %v581
    %vm791 = vcmask 1014784
    %v792 = vsel %vm791, %v790, %v585
    %vm793 = vcmask 64512
    %v794 = vsel %vm793, %v585, %v589
    %vm795 = vcmask 162816
    %v796 = vsel %vm795, %v794, %v593
    %vm797 = vcmask 261120
    %v798 = vsel %vm797, %v796, %v597
    %vm799 = vcmask 359424
    %v800 = vsel %vm799, %v798, %v601
    %vm801 = vcmask 457728
    %v802 = vsel %vm801, %v800, %v605
    %vm803 = vcmask 556032
    %v804 = vsel %vm803, %v802, %v609
    %vm805 = vcmask 654336
    %v806 = vsel %vm805, %v804, %v613
    %vm807 = vcmask 752640
    %v808 = vsel %vm807, %v806, %v617
    %vm809 = vcmask 850944
    %v810 = vsel %vm809, %v808, %v621
    %vm811 = vcmask 949248
    %v812 = vsel %vm811, %v810, %v625
    %v813 = vsel %vm751, %v322, %v629
    %v814 = vsel %vm753, %v813, %v633
    %v815 = vsel %vm755, %v814, %v637
    %v816 = vsel %vm757, %v815, %v641
    %v817 = vsel %vm759, %v816, %v645
    %v818 = vsel %vm761, %v817, %v649
    %v819 = vsel %vm763, %v818, %v653
    %v820 = vsel %vm765, %v819, %v657
    %v821 = vsel %vm767, %v820, %v661
    %v822 = vsel %vm769, %v821, %v665
    %v823 = vsel %vm771, %v665, %v669
    %v824 = vsel %vm773, %v823, %v673
    %v825 = vsel %vm775, %v824, %v677
    %v826 = vsel %vm777, %v825, %v681
    %v827 = vsel %vm779, %v826, %v685
    %v828 = vsel %vm781, %v827, %v689
    %v829 = vsel %vm783, %v828, %v693
    %v830 = vsel %vm785, %v829, %v697
    %v831 = vsel %vm787, %v830, %v701
    %v832 = vsel %vm789, %v831, %v705
    %v833 = vsel %vm791, %v832, %v709
    %v834 = vsel %vm793, %v709, %v713
    %v835 = vsel %vm795, %v834, %v717
    %v836 = vsel %vm797, %v835, %v721
    %v837 = vsel %vm799, %v836, %v725
    %v838 = vsel %vm801, %v837, %v729
    %v839 = vsel %vm803, %v838, %v733
    %v840 = vsel %vm805, %v839, %v737
    %v841 = vsel %vm807, %v840, %v741
    %v842 = vsel %vm809, %v841, %v745
    %v843 = vsel %vm811, %v842, %v749
    %v850 = vrot.slane %v792, 6
    %v851 = vrot.slane %v812, 4
    %v852 = vrot.slane %v822, 2
    %v853 = vrot.slane %v843, 6
    %vm854 = vcmask 1041408
    %v855 = vsel %vm854, %v770, %v850
    %vm856 = vcmask 1045508
    %v857 = vsel %vm856, %v851, %v852
    %vm858 = vcmask 1043456
    %v859 = vsel %vm858, %v855, %v857
    %v860 = vsel %vm854, %v833, %v853
    %863 = vst [vmem:[#allocation2] sm:$0xff] %v859
    %864 = vst [vmem:[#allocation2 + $0x8] sm:$0xf] %v860
    %v865 = vld [vmem:[%s1] sm:$0xff]
    %v866 = vld [vmem:[%s1 + $0x8] sm:$0xff]
    %867 = vxpose.xlu0.b32.start [1/16] %v865, 128
    %868 = vxpose.xlu0.b32.cont [2/16] 0.0, 128
    %869 = vxpose.xlu0.b32.cont [3/16] 0.0, 128
    %870 = vxpose.xlu0.b32.cont [4/16] 0.0, 128
    %871 = vxpose.xlu0.b32.cont [5/16] 0.0, 128
    %872 = vxpose.xlu0.b32.cont [6/16] 0.0, 128
    %873 = vxpose.xlu0.b32.cont [7/16] 0.0, 128
    %874 = vxpose.xlu0.b32.cont [8/16] 0.0, 128
    %875 = vxpose.xlu0.b32.cont [9/16] 0.0, 128
    %876 = vxpose.xlu0.b32.cont [10/16] 0.0, 128
    %877 = vxpose.xlu0.b32.cont [11/16] 0.0, 128
    %878 = vxpose.xlu0.b32.cont [12/16] 0.0, 128
    %879 = vxpose.xlu0.b32.cont [13/16] 0.0, 128
    %880 = vxpose.xlu0.b32.cont [14/16] 0.0, 128
    %881 = vxpose.xlu0.b32.cont [15/16] 0.0, 128
    %882 = vxpose.xlu0.b32.end [16/16] 0.0, 128
    %v883 = vpop.trf.xlu0
    %v884 = vpop.trf.xlu0
    %v885 = vpop.trf.xlu0
    %v886 = vpop.trf.xlu0
    %v887 = vpop.trf.xlu0
    %v888 = vpop.trf.xlu0
    %v889 = vpop.trf.xlu0
    %v890 = vpop.trf.xlu0
    %v891 = vpop.trf.xlu0
    %v892 = vpop.trf.xlu0
    %v893 = vpop.trf.xlu0
    %v894 = vpop.trf.xlu0
    %v895 = vpop.trf.xlu0
    %v896 = vpop.trf.xlu0
    %v897 = vpop.trf.xlu0
    %v898 = vpop.trf.xlu0
    %899 = vxpose.xlu0.b32.start [1/16] %v866, 128
    %900 = vxpose.xlu0.b32.cont [2/16] 0.0, 128
    %901 = vxpose.xlu0.b32.cont [3/16] 0.0, 128
    %902 = vxpose.xlu0.b32.cont [4/16] 0.0, 128
    %903 = vxpose.xlu0.b32.cont [5/16] 0.0, 128
    %904 = vxpose.xlu0.b32.cont [6/16] 0.0, 128
    %905 = vxpose.xlu0.b32.cont [7/16] 0.0, 128
    %906 = vxpose.xlu0.b32.cont [8/16] 0.0, 128
    %907 = vxpose.xlu0.b32.cont [9/16] 0.0, 128
    %908 = vxpose.xlu0.b32.cont [10/16] 0.0, 128
    %909 = vxpose.xlu0.b32.cont [11/16] 0.0, 128
    %910 = vxpose.xlu0.b32.cont [12/16] 0.0, 128
    %911 = vxpose.xlu0.b32.cont [13/16] 0.0, 128
    %912 = vxpose.xlu0.b32.cont [14/16] 0.0, 128
    %913 = vxpose.xlu0.b32.cont [15/16] 0.0, 128
    %914 = vxpose.xlu0.b32.end [16/16] 0.0, 128
    %v915 = vpop.trf.xlu0
    %v916 = vpop.trf.xlu0
    %v917 = vpop.trf.xlu0
    %v918 = vpop.trf.xlu0
    %v919 = vpop.trf.xlu0
    %v920 = vpop.trf.xlu0
    %v921 = vpop.trf.xlu0
    %v922 = vpop.trf.xlu0
    %v923 = vpop.trf.xlu0
    %v924 = vpop.trf.xlu0
    %v925 = vpop.trf.xlu0
    %v926 = vpop.trf.xlu0
    %v927 = vpop.trf.xlu0
    %v928 = vpop.trf.xlu0
    %v929 = vpop.trf.xlu0
    %v930 = vpop.trf.xlu0
    %v931 = vrot.slane %v883, 4
    %v932 = vsel %vm87, 0.0, %v931
    %v934 = vunpack.c.l.s4 1983009808
    %v935 = vunpack.c.0.s8 %v934
    %v936 = vperm.slane %v883, %v935
    %v938 = vunpack.c.l.s4 1983009808
    %v939 = vunpack.c.0.s8 %v938
    %v940 = vperm.slane %v932, %v939
    %v941 = vrot.slane %v915, 4
    %v942 = vsel %vm87, 0.0, %v941
    %v944 = vunpack.c.l.s4 1983009808
    %v945 = vunpack.c.0.s8 %v944
    %v946 = vperm.slane %v915, %v945
    %v948 = vunpack.c.l.s4 1983009808
    %v949 = vunpack.c.0.s8 %v948
    %v950 = vperm.slane %v942, %v949
    %v951 = vrot.slane %v946, 4
    %v952 = vsel %vm87, %v951, %v936
    %v953 = vrot.slane %v936, 4
    %v954 = vsel %vm87, %v946, %v953
    %v956 = vunpack.c.l.s4 1934713408
    %v957 = vunpack.c.0.s8 %v956
    %v958 = vperm.slane %v952, %v957
    %v960 = vunpack.c.l.s4 1934713408
    %v961 = vunpack.c.0.s8 %v960
    %v962 = vperm.slane %v954, %v961
    %v963 = vrot.slane %v950, 4
    %v964 = vsel %vm87, %v963, %v940
    %v965 = vrot.slane %v940, 4
    %v966 = vsel %vm87, %v950, %v965
    %v968 = vunpack.c.l.s4 1934713408
    %v969 = vunpack.c.0.s8 %v968
    %v970 = vperm.slane %v964, %v969
    %v972 = vunpack.c.l.s4 1934713408
    %v973 = vunpack.c.0.s8 %v972
    %v974 = vperm.slane %v966, %v973
    %v975 = vrot.slane %v958, 4
    %v976 = vsel %vm87, 0.0, %v975
    %v977 = vrot.slane %v962, 4
    %v978 = vsel %vm87, 0.0, %v977
    %v979 = vrot.slane %v970, 4
    %v980 = vsel %vm87, 0.0, %v979
    %v981 = vrot.slane %v974, 4
    %v982 = vsel %vm87, 0.0, %v981
    %v983 = vrot.slane %v884, 4
    %v984 = vsel %vm87, 0.0, %v983
    %v986 = vunpack.c.l.s4 1983009808
    %v987 = vunpack.c.0.s8 %v986
    %v988 = vperm.slane %v884, %v987
    %v990 = vunpack.c.l.s4 1983009808
    %v991 = vunpack.c.0.s8 %v990
    %v992 = vperm.slane %v984, %v991
    %v993 = vrot.slane %v916, 4
    %v994 = vsel %vm87, 0.0, %v993
    %v996 = vunpack.c.l.s4 1983009808
    %v997 = vunpack.c.0.s8 %v996
    %v998 = vperm.slane %v916, %v997
    %v1000 = vunpack.c.l.s4 1983009808
    %v1001 = vunpack.c.0.s8 %v1000
    %v1002 = vperm.slane %v994, %v1001
    %v1003 = vrot.slane %v998, 4
    %v1004 = vsel %vm87, %v1003, %v988
    %v1005 = vrot.slane %v988, 4
    %v1006 = vsel %vm87, %v998, %v1005
    %v1008 = vunpack.c.l.s4 1934713408
    %v1009 = vunpack.c.0.s8 %v1008
    %v1010 = vperm.slane %v1004, %v1009
    %v1012 = vunpack.c.l.s4 1934713408
    %v1013 = vunpack.c.0.s8 %v1012
    %v1014 = vperm.slane %v1006, %v1013
    %v1015 = vrot.slane %v1002, 4
    %v1016 = vsel %vm87, %v1015, %v992
    %v1017 = vrot.slane %v992, 4
    %v1018 = vsel %vm87, %v1002, %v1017
    %v1020 = vunpack.c.l.s4 1934713408
    %v1021 = vunpack.c.0.s8 %v1020
    %v1022 = vperm.slane %v1016, %v1021
    %v1024 = vunpack.c.l.s4 1934713408
    %v1025 = vunpack.c.0.s8 %v1024
    %v1026 = vperm.slane %v1018, %v1025
    %v1027 = vrot.slane %v1010, 4
    %v1028 = vsel %vm87, 0.0, %v1027
    %v1029 = vrot.slane %v1014, 4
    %v1030 = vsel %vm87, 0.0, %v1029
    %v1031 = vrot.slane %v1022, 4
    %v1032 = vsel %vm87, 0.0, %v1031
    %v1033 = vrot.slane %v1026, 4
    %v1034 = vsel %vm87, 0.0, %v1033
    %1036 = vrot.lane.b32.xlu0 %v976, 8
    %v1037 = vpop.permute.xlu0 %1036
    %1040 = vrot.lane.b32.xlu0 %v962, 16
    %v1041 = vpop.permute.xlu0 %1040
    %1044 = vrot.lane.b32.xlu0 %v978, 24
    %v1045 = vpop.permute.xlu0 %1044
    %1048 = vrot.lane.b32.xlu0 %v970, 32
    %v1049 = vpop.permute.xlu0 %1048
    %1052 = vrot.lane.b32.xlu0 %v980, 40
    %v1053 = vpop.permute.xlu0 %1052
    %1056 = vrot.lane.b32.xlu0 %v974, 48
    %v1057 = vpop.permute.xlu0 %1056
    %1060 = vrot.lane.b32.xlu0 %v982, 56
    %v1061 = vpop.permute.xlu0 %1060
    %1064 = vrot.lane.b32.xlu0 %v1010, 64
    %v1065 = vpop.permute.xlu0 %1064
    %1068 = vrot.lane.b32.xlu0 %v1028, 72
    %v1069 = vpop.permute.xlu0 %1068
    %1072 = vrot.lane.b32.xlu0 %v1014, 80
    %v1073 = vpop.permute.xlu0 %1072
    %1076 = vrot.lane.b32.xlu0 %v1030, 88
    %v1077 = vpop.permute.xlu0 %1076
    %1080 = vrot.lane.b32.xlu0 %v1022, 96
    %v1081 = vpop.permute.xlu0 %1080
    %1084 = vrot.lane.b32.xlu0 %v1032, 104
    %v1085 = vpop.permute.xlu0 %1084
    %1088 = vrot.lane.b32.xlu0 %v1026, 112
    %v1089 = vpop.permute.xlu0 %1088
    %1092 = vrot.lane.b32.xlu0 %v1034, 120
    %v1093 = vpop.permute.xlu0 %1092
    %v1095 = vsel %vm793, %v958, %v1037
    %v1096 = vsel %vm773, %v1095, %v1041
    %v1097 = vsel %vm753, %v1096, %v1045
    %v1098 = vsel %vm797, %v1097, %v1049
    %v1099 = vsel %vm777, %v1098, %v1053
    %v1100 = vsel %vm757, %v1099, %v1057
    %v1101 = vsel %vm801, %v1100, %v1061
    %v1102 = vsel %vm781, %v1101, %v1065
    %v1103 = vsel %vm761, %v1102, %v1069
    %v1104 = vsel %vm805, %v1103, %v1073
    %v1105 = vsel %vm785, %v1104, %v1077
    %v1106 = vsel %vm765, %v1105, %v1081
    %v1107 = vsel %vm809, %v1106, %v1085
    %v1108 = vsel %vm789, %v1107, %v1089
    %v1109 = vsel %vm769, %v1108, %v1093
    %1110 = vst [vmem:[#allocation2 + $0xc] sm:$0x3] %v1109
    %v1111 = vld [vmem:[%s2] sm:$0xff]
    %v1112 = vld [vmem:[%s2 + $0x8] sm:$0xff]
    %1113 = vxpose.xlu0.b32.start [1/16] %v1111, 128
    %1114 = vxpose.xlu0.b32.cont [2/16] 0.0, 128
    %1115 = vxpose.xlu0.b32.cont [3/16] 0.0, 128
    %1116 = vxpose.xlu0.b32.cont [4/16] 0.0, 128
    %1117 = vxpose.xlu0.b32.cont [5/16] 0.0, 128
    %1118 = vxpose.xlu0.b32.cont [6/16] 0.0, 128
    %1119 = vxpose.xlu0.b32.cont [7/16] 0.0, 128
    %1120 = vxpose.xlu0.b32.cont [8/16] 0.0, 128
    %1121 = vxpose.xlu0.b32.cont [9/16] 0.0, 128
    %1122 = vxpose.xlu0.b32.cont [10/16] 0.0, 128
    %1123 = vxpose.xlu0.b32.cont [11/16] 0.0, 128
    %1124 = vxpose.xlu0.b32.cont [12/16] 0.0, 128
    %1125 = vxpose.xlu0.b32.cont [13/16] 0.0, 128
    %1126 = vxpose.xlu0.b32.cont [14/16] 0.0, 128
    %1127 = vxpose.xlu0.b32.cont [15/16] 0.0, 128
    %1128 = vxpose.xlu0.b32.end [16/16] 0.0, 128
    %v1129 = vpop.trf.xlu0
    %v1130 = vpop.trf.xlu0
    %v1131 = vpop.trf.xlu0
    %v1132 = vpop.trf.xlu0
    %v1133 = vpop.trf.xlu0
    %v1134 = vpop.trf.xlu0
    %v1135 = vpop.trf.xlu0
    %v1136 = vpop.trf.xlu0
    %v1137 = vpop.trf.xlu0
    %v1138 = vpop.trf.xlu0
    %v1139 = vpop.trf.xlu0
    %v1140 = vpop.trf.xlu0
    %v1141 = vpop.trf.xlu0
    %v1142 = vpop.trf.xlu0
    %v1143 = vpop.trf.xlu0
    %v1144 = vpop.trf.xlu0
    %1145 = vxpose.xlu0.b32.start [1/16] %v1112, 128
    %1146 = vxpose.xlu0.b32.cont [2/16] 0.0, 128
    %1147 = vxpose.xlu0.b32.cont [3/16] 0.0, 128
    %1148 = vxpose.xlu0.b32.cont [4/16] 0.0, 128
    %1149 = vxpose.xlu0.b32.cont [5/16] 0.0, 128
    %1150 = vxpose.xlu0.b32.cont [6/16] 0.0, 128
    %1151 = vxpose.xlu0.b32.cont [7/16] 0.0, 128
    %1152 = vxpose.xlu0.b32.cont [8/16] 0.0, 128
    %1153 = vxpose.xlu0.b32.cont [9/16] 0.0, 128
    %1154 = vxpose.xlu0.b32.cont [10/16] 0.0, 128
    %1155 = vxpose.xlu0.b32.cont [11/16] 0.0, 128
    %1156 = vxpose.xlu0.b32.cont [12/16] 0.0, 128
    %1157 = vxpose.xlu0.b32.cont [13/16] 0.0, 128
    %1158 = vxpose.xlu0.b32.cont [14/16] 0.0, 128
    %1159 = vxpose.xlu0.b32.cont [15/16] 0.0, 128
    %1160 = vxpose.xlu0.b32.end [16/16] 0.0, 128
    %v1161 = vpop.trf.xlu0
    %v1162 = vpop.trf.xlu0
    %v1163 = vpop.trf.xlu0
    %v1164 = vpop.trf.xlu0
    %v1165 = vpop.trf.xlu0
    %v1166 = vpop.trf.xlu0
    %v1167 = vpop.trf.xlu0
    %v1168 = vpop.trf.xlu0
    %v1169 = vpop.trf.xlu0
    %v1170 = vpop.trf.xlu0
    %v1171 = vpop.trf.xlu0
    %v1172 = vpop.trf.xlu0
    %v1173 = vpop.trf.xlu0
    %v1174 = vpop.trf.xlu0
    %v1175 = vpop.trf.xlu0
    %v1176 = vpop.trf.xlu0
    %v1178 = vunpack.c.l.s4 1983009808
    %v1179 = vunpack.c.0.s8 %v1178
    %v1180 = vperm.slane %v1129, %v1179
    %v1182 = vunpack.c.l.s4 1983009808
    %v1183 = vunpack.c.0.s8 %v1182
    %v1184 = vperm.slane %v1161, %v1183
    %v1185 = vrot.slane %v1184, 4
    %v1186 = vsel %vm87, %v1185, %v1180
    %v1187 = vrot.slane %v1180, 4
    %v1188 = vsel %vm87, %v1184, %v1187
    %v1190 = vunpack.c.l.s4 1934713408
    %v1191 = vunpack.c.0.s8 %v1190
    %v1192 = vperm.slane %v1186, %v1191
    %v1194 = vunpack.c.l.s4 1934713408
    %v1195 = vunpack.c.0.s8 %v1194
    %v1196 = vperm.slane %v1188, %v1195
    %v1197 = vrot.slane %v1192, 4
    %v1198 = vsel %vm87, 0.0, %v1197
    %v1199 = vrot.slane %v1196, 4
    %v1200 = vsel %vm87, 0.0, %v1199
    %1202 = vrot.lane.b32.xlu0 %v1198, 8
    %v1203 = vpop.permute.xlu0 %1202
    %1206 = vrot.lane.b32.xlu0 %v1196, 16
    %v1207 = vpop.permute.xlu0 %1206
    %1210 = vrot.lane.b32.xlu0 %v1200, 24
    %v1211 = vpop.permute.xlu0 %1210
    %v1213 = vsel %vm793, %v1192, %v1203
    %v1214 = vsel %vm773, %v1213, %v1207
    %v1215 = vsel %vm753, %v1214, %v1211
    %vm1216 = vcmask 254976
    %1217 = vst.msk [vmem:[#allocation2 + $0xe] sm:$0x3] %vm1216, %v1215
    %v1218 = vld [vmem:[%s3] sm:$0xff]
    %v1219 = vld [vmem:[%s3 + $0x8] sm:$0xff]
    %v1222 = vrot.slane %v1218, 2
    %v1223 = vrot.slane %v1218, 4
    %v1224 = vrot.slane %v1218, 6
    %v1225 = vrot.slane %v1219, 2
    %v1226 = vrot.slane %v1219, 4
    %v1227 = vrot.slane %v1219, 6
    %1228 = vst [vmem:[#allocation1] ss:$4 sm:$0xff] %v1218
    %s1229 = scalar_lea.vmem [#allocation1], 1
    %1230 = vst [vmem:[%s1229] ss:$4 sm:$0xff] %v1222
    %s1231 = scalar_lea.vmem [#allocation1], 2
    %1232 = vst [vmem:[%s1231] ss:$4 sm:$0xff] %v1223
    %s1233 = scalar_lea.vmem [#allocation1], 3
    %1234 = vst [vmem:[%s1233] ss:$4 sm:$0xff] %v1224
    %v1235 = vld.sshfl [vmem:[#allocation1] sm:$0xff pattern:$0x73625140]
    %s1236 = scalar_lea.vmem [#allocation1], 32
    %1237 = vst [vmem:[%s1236] ss:$4 sm:$0xff] %v1219
    %s1238 = scalar_lea.vmem [#allocation1], 33
    %1239 = vst [vmem:[%s1238] ss:$4 sm:$0xff] %v1225
    %s1240 = scalar_lea.vmem [#allocation1], 34
    %1241 = vst [vmem:[%s1240] ss:$4 sm:$0xff] %v1226
    %s1242 = scalar_lea.vmem [#allocation1], 35
    %1243 = vst [vmem:[%s1242] ss:$4 sm:$0xff] %v1227
    %v1244 = vld.sshfl [vmem:[#allocation1 + $0x20] sm:$0xff pattern:$0x73625140]
    %1245 = vset.pattern.permute.xlu0 0
    %1246 = vperm.xlu0 %1245, %v1235
    %v1247 = vpop.permute.xlu0 %1246
    %1248 = vset.pattern.permute.xlu0 0
    %1249 = vperm.xlu0 %1248, %v1244
    %v1250 = vpop.permute.xlu0 %1249
    %v1251 = vlaneseq
    %v1252 = vand.u32 %v1251, 127
    %v1253 = vadd.s32 %v1252, 4294967264
    %v1254 = vperm.slane %v1247, %v1253
    %v1255 = vperm.slane %v1250, %v1253
    %vm1256 = vcmask 1041409
    %v1257 = vsel %vm1256, %v1255, %v1254
    %vm1259 = vcmask 320768
    %1260 = vst.msk [vmem:[#allocation2 + $0xe] sm:$0x3] %vm1259, %v1257
    // Predicated region
    $region18: #{tpu_custom_call.1} parent=1 // pred_check
      _
    $region19: #{tpu_custom_call.1} parent=1 // pred_check_branch
      %1262 = sbr.rel (0) target = $region21
    $region20: #{tpu_custom_call.1} parent=1 // pred_region
      %1264 = vsyncadd [#allocation3], 0
      %s1266 = sshll.u32 [#allocation2], 4
      %s1267 = int_to_ptr.vmem [resolvable:$true] %s1266
      %s1268 = sshll.u32 %s4, 4
      %s1269 = int_to_ptr.hbm [resolvable:$true] %s1268
      %1271 = dma.vmem_to_hbm [thread:$0]  %s1267, 256, %s1269, [#allocation3]
    $region21: #{tpu_custom_call.1} parent=1 // pred_fallthru
      _
    // Predicated region
    $region22: #{tpu_custom_call.1} parent=1 // pred_check
      _
    $region23: #{tpu_custom_call.1} parent=1 // pred_check_branch
      %1273 = sbr.rel (0) target = $region25
    $region24: #{tpu_custom_call.1} parent=1 // pred_region
      %1275 = dma.done [#allocation3], 256
    $region25: #{tpu_custom_call.1} parent=1 // pred_fallthru
      _
    %1276 = vsyncpa [#allocation3], 1

</llo_original>
